<compile_context>
chip_gen: v5e
topology: v5e:2x2
jax: 0.10.0
libtpu: 0.0.40
codegen_flags: <defaults>
</compile_context>

<pallas_src>
import jax
import jax.numpy as jnp
from jax import lax
from jax.experimental import pallas as pl
from jax.experimental.pallas import tpu as pltpu


# ---------------- Pallas kernel ----------------

def lstm_kernel(x_ref, h0_ref, c0_ref, wih_ref, whh_ref, bih_ref, bhh_ref, out_ref):
    """Full-sequence LSTM recurrence, everything resident in VMEM.

    x_ref:   (T*B, 1)   inputs, flattened (input_size == 1), row order (t, b)
    h0_ref:  (B, H)     initial hidden state
    c0_ref:  (B, H)     initial cell state
    wih_ref: (1, 4H)    W_ih^T (free bitcast of PyTorch (4H, 1); gate order i|f|g|o)
    whh_ref: (4H, H)    W_hh in PyTorch layout (contracted transposed on the MXU)
    bih_ref: (1, 4H)    b_ih
    bhh_ref: (1, 4H)    b_hh
    out_ref: (1, 2*B*H) lane-dense packed [h_b0 | h_b1 | ... | c_b0 | c_b1 | ...]
    """
    B, H = h0_ref.shape
    T = x_ref.shape[0] // B

    # ---- loop-invariant work (hoisted above the recurrence) ----
    whh = whh_ref[...]                                   # (4H, H)
    bsum = bih_ref[...] + bhh_ref[...]                   # (1, 4H)
    # Input contribution for every timestep at once: (T*B,1) * (1,4H) + (1,4H) -> (T*B,4H).
    xwb = x_ref[...] * wih_ref[...] + bsum               # off the h->h critical path

    # Lane mask: gate g (lanes [2H, 3H)) uses tanh, gates i/f/o use sigmoid.
    lane = lax.broadcasted_iota(jnp.int32, (B, 4 * H), 1)
    tanh_lanes = (lane >= 2 * H) & (lane < 3 * H)

    # NT matmul: contract H of h (B,H) against dim 1 of W_hh (4H,H) -> (B,4H).
    nt_dims = (((1,), (1,)), ((), ()))

    h = h0_ref[...]
    c = c0_ref[...]

    # Sequential recurrence (inherent to LSTM); fully static unroll for LLO visibility.
    for t in range(T):
        gates = lax.dot_general(h, whh, nt_dims,
                                preferred_element_type=jnp.float32)
        gates = gates + xwb[t * B:(t + 1) * B, :]        # static slice, not on h-chain
        # One EUP push for the whole (B,4H) slab:
        #   tanh lanes: tanh(x);  sigmoid lanes: sigmoid(x) = 0.5*(tanh(x/2)+1)  (exact).
        pre = jnp.where(tanh_lanes, gates, 0.5 * gates)
        th = jnp.tanh(pre)
        act = jnp.where(tanh_lanes, th, 0.5 * (th + 1.0))
        i_g = act[:, 0 * H:1 * H]
        f_g = act[:, 1 * H:2 * H]
        g_g = act[:, 2 * H:3 * H]
        o_g = act[:, 3 * H:4 * H]
        c = f_g * c + i_g * g_g
        h = o_g * jnp.tanh(c)

    # Lane-dense packed output: [h rows | c rows] along the lane dim -> (1, 2*B*H).
    pieces = [h[b:b + 1, :] for b in range(B)] + [c[b:b + 1, :] for b in range(B)]
    out_ref[...] = jnp.concatenate(pieces, axis=1)


# ---------------- wrapper ----------------

def decoder_lstm_forward(x, enc_hidden_state, enc_cell_state, w_ih, w_hh, b_ih, b_hh):
    """Matches DecoderLSTM.forward: returns (hidden_state, cell_state), each (1, B, H).

    Inputs are expected float32 (PyTorch default):
      x:                (T, B, 1)
      enc_hidden_state: (1, B, H)
      enc_cell_state:   (1, B, H)
      w_ih: (4H, 1), w_hh: (4H, H), b_ih: (4H,), b_hh: (4H,)   (PyTorch nn.LSTM layout)

    Only zero-copy reshapes are done here; transpose / bias-add / activations all live
    inside the single pallas_call.
    """
    T, B, _ = x.shape
    H = enc_hidden_state.shape[-1]

    vmem = pl.BlockSpec(memory_space=pltpu.MemorySpace.VMEM)
    packed = pl.pallas_call(
        lstm_kernel,
        out_shape=jax.ShapeDtypeStruct((1, 2 * B * H), jnp.float32),
        in_specs=[vmem] * 7,
        out_specs=vmem,
    )(x.reshape(T * B, 1),                       # (T,B,1) -> (T*B,1): bitcast
      enc_hidden_state.reshape(B, H),            # (1,B,H) -> (B,H):   bitcast
      enc_cell_state.reshape(B, H),
      w_ih.reshape(1, 4 * H),                    # (4H,1) -> (1,4H):   bitcast
      w_hh,                                      # (4H,H) as-is; NT-contracted in kernel
      b_ih.reshape(1, 4 * H),
      b_hh.reshape(1, 4 * H))

    hc = packed.reshape(2, B, H)                 # [h | c] along the packed lane dim
    return hc[0:1], hc[1:2]                      # each (1, B, H)


# ---------------- pure-JAX reference (for a sanity check) ----------------

def _reference_lstm(x, h0, c0, w_ih, w_hh, b_ih, b_hh):
    T, B, _ = x.shape
    H = h0.shape[-1]
    wih_t, whh_t = w_ih.T, w_hh.T
    b = (b_ih + b_hh).reshape(1, 4 * H)

    def step(carry, x_t):
        h, c = carry
        gates = x_t @ wih_t + h @ whh_t + b
        i_g = jax.nn.sigmoid(gates[:, 0 * H:1 * H])
        f_g = jax.nn.sigmoid(gates[:, 1 * H:2 * H])
        g_g = jnp.tanh(gates[:, 2 * H:3 * H])
        o_g = jax.nn.sigmoid(gates[:, 3 * H:4 * H])
        c_new = f_g * c + i_g * g_g
        h_new = o_g * jnp.tanh(c_new)
        return (h_new, c_new), None

    (h_fin, c_fin), _ = lax.scan(step, (h0.reshape(B, H), c0.reshape(B, H)), x)
    return h_fin.reshape(1, B, H), c_fin.reshape(1, B, H)


if __name__ == "__main__":
    T, B, H = 8, 2, 32    # seq=8, batch=2, hidden_dim=32 (input_size fixed to 1 by the module)

    key = jax.random.PRNGKey(0)
    ks = jax.random.split(key, 7)
    scale = 1.0 / jnp.sqrt(jnp.float32(H))
    x = jax.random.normal(ks[0], (T, B, 1), dtype=jnp.float32)
    h0 = jax.random.normal(ks[1], (1, B, H), dtype=jnp.float32)
    c0 = jax.random.normal(ks[2], (1, B, H), dtype=jnp.float32)
    w_ih = scale * jax.random.normal(ks[3], (4 * H, 1), dtype=jnp.float32)
    w_hh = scale * jax.random.normal(ks[4], (4 * H, H), dtype=jnp.float32)
    b_ih = scale * jax.random.normal(ks[5], (4 * H,), dtype=jnp.float32)
    b_hh = scale * jax.random.normal(ks[6], (4 * H,), dtype=jnp.float32)

    fwd = jax.jit(decoder_lstm_forward)
    h_n, c_n = fwd(x, h0, c0, w_ih, w_hh, b_ih, b_hh)
    h_n, c_n = jax.block_until_ready((h_n, c_n))

    assert h_n.shape == (1, B, H) and c_n.shape == (1, B, H)
    assert h_n.dtype == jnp.float32 and c_n.dtype == jnp.float32
    assert bool(jnp.all(jnp.isfinite(h_n))) and bool(jnp.all(jnp.isfinite(c_n)))

    h_ref, c_ref = _reference_lstm(x, h0, c0, w_ih, w_hh, b_ih, b_hh)
    assert bool(jnp.allclose(h_n, h_ref, rtol=2e-3, atol=2e-3))
    assert bool(jnp.allclose(c_n, c_ref, rtol=2e-3, atol=2e-3))

    print("KERNEL_OK")
</pallas_src>

<mosaic_0001>
module attributes {stable_mosaic.version = 11 : i64} {
  func.func @lstm_kernel(%arg0: memref<16x1xf32, #tpu.memory_space<vmem>>, %arg1: memref<2x32xf32, #tpu.memory_space<vmem>>, %arg2: memref<2x32xf32, #tpu.memory_space<vmem>>, %arg3: memref<1x128xf32, #tpu.memory_space<vmem>>, %arg4: memref<128x32xf32, #tpu.memory_space<vmem>>, %arg5: memref<1x128xf32, #tpu.memory_space<vmem>>, %arg6: memref<1x128xf32, #tpu.memory_space<vmem>>, %arg7: memref<1x128xf32, #tpu.memory_space<vmem>>) attributes {dimension_semantics = [], scalar_prefetch = 0 : i64, scratch_operands = 0 : i64, tpu.core_type = #tpu.core_type<tc>} {
    %c0 = arith.constant 0 : index
    %c0_0 = arith.constant 0 : index
    %0 = vector.load %arg4[%c0, %c0_0] : memref<128x32xf32, #tpu.memory_space<vmem>>, vector<128x32xf32>
    %c0_1 = arith.constant 0 : index
    %c0_2 = arith.constant 0 : index
    %1 = vector.load %arg5[%c0_1, %c0_2] : memref<1x128xf32, #tpu.memory_space<vmem>>, vector<1x128xf32>
    %c0_3 = arith.constant 0 : index
    %c0_4 = arith.constant 0 : index
    %2 = vector.load %arg6[%c0_3, %c0_4] : memref<1x128xf32, #tpu.memory_space<vmem>>, vector<1x128xf32>
    %3 = arith.addf %1, %2 : vector<1x128xf32>
    %c0_5 = arith.constant 0 : index
    %c0_6 = arith.constant 0 : index
    %4 = vector.load %arg0[%c0_5, %c0_6] : memref<16x1xf32, #tpu.memory_space<vmem>>, vector<16x1xf32>
    %c0_7 = arith.constant 0 : index
    %c0_8 = arith.constant 0 : index
    %5 = vector.load %arg3[%c0_7, %c0_8] : memref<1x128xf32, #tpu.memory_space<vmem>>, vector<1x128xf32>
    %6 = vector.broadcast %4 : vector<16x1xf32> to vector<16x128xf32>
    %7 = vector.broadcast %5 : vector<1x128xf32> to vector<16x128xf32>
    %8 = arith.mulf %6, %7 : vector<16x128xf32>
    %9 = vector.broadcast %3 : vector<1x128xf32> to vector<16x128xf32>
    %10 = arith.addf %8, %9 : vector<16x128xf32>
    %11 = tpu.iota {dimensions = array<i32: 1>} : vector<2x128xi32>
    %c64_i32 = arith.constant 64 : i32
    %12 = vector.broadcast %c64_i32 : i32 to vector<2x128xi32>
    %13 = arith.cmpi sge, %11, %12 : vector<2x128xi32>
    %c96_i32 = arith.constant 96 : i32
    %14 = vector.broadcast %c96_i32 : i32 to vector<2x128xi32>
    %15 = arith.cmpi slt, %11, %14 : vector<2x128xi32>
    %16 = arith.andi %13, %15 : vector<2x128xi1>
    %c0_9 = arith.constant 0 : index
    %c0_10 = arith.constant 0 : index
    %17 = vector.load %arg1[%c0_9, %c0_10] : memref<2x32xf32, #tpu.memory_space<vmem>>, vector<2x32xf32>
    %c0_11 = arith.constant 0 : index
    %c0_12 = arith.constant 0 : index
    %18 = vector.load %arg2[%c0_11, %c0_12] : memref<2x32xf32, #tpu.memory_space<vmem>>, vector<2x32xf32>
    %cst = arith.constant dense<0.000000e+00> : vector<2x128xf32>
    %19 = tpu.matmul %17, %0, %cst {dimension_numbers = #tpu.dot_dimension_numbers<[1], [1], [0], [0], [0, 0, 1, 0], [], []>} : vector<2x32xf32>, vector<128x32xf32>, vector<2x128xf32> -> vector<2x128xf32>
    %20 = vector.extract_strided_slice %10 {offsets = [0, 0], sizes = [2, 128], strides = [1, 1]} : vector<16x128xf32> to vector<2x128xf32>
    %21 = arith.addf %19, %20 : vector<2x128xf32>
    %cst_13 = arith.constant 5.000000e-01 : f32
    %22 = vector.broadcast %cst_13 : f32 to vector<2x128xf32>
    %23 = arith.mulf %22, %21 : vector<2x128xf32>
    %24 = arith.select %16, %21, %23 : vector<2x128xi1>, vector<2x128xf32>
    %25 = math.tanh %24 : vector<2x128xf32>
    %cst_14 = arith.constant 1.000000e+00 : f32
    %26 = vector.broadcast %cst_14 : f32 to vector<2x128xf32>
    %27 = arith.addf %25, %26 : vector<2x128xf32>
    %cst_15 = arith.constant 5.000000e-01 : f32
    %28 = vector.broadcast %cst_15 : f32 to vector<2x128xf32>
    %29 = arith.mulf %28, %27 : vector<2x128xf32>
    %30 = arith.select %16, %25, %29 : vector<2x128xi1>, vector<2x128xf32>
    %31 = vector.extract_strided_slice %30 {offsets = [0, 0], sizes = [2, 32], strides = [1, 1]} : vector<2x128xf32> to vector<2x32xf32>
    %32 = vector.extract_strided_slice %30 {offsets = [0, 32], sizes = [2, 32], strides = [1, 1]} : vector<2x128xf32> to vector<2x32xf32>
    %33 = vector.extract_strided_slice %30 {offsets = [0, 64], sizes = [2, 32], strides = [1, 1]} : vector<2x128xf32> to vector<2x32xf32>
    %34 = vector.extract_strided_slice %30 {offsets = [0, 96], sizes = [2, 32], strides = [1, 1]} : vector<2x128xf32> to vector<2x32xf32>
    %35 = arith.mulf %32, %18 : vector<2x32xf32>
    %36 = arith.mulf %31, %33 : vector<2x32xf32>
    %37 = arith.addf %35, %36 : vector<2x32xf32>
    %38 = math.tanh %37 : vector<2x32xf32>
    %39 = arith.mulf %34, %38 : vector<2x32xf32>
    %cst_16 = arith.constant dense<0.000000e+00> : vector<2x128xf32>
    %40 = tpu.matmul %39, %0, %cst_16 {dimension_numbers = #tpu.dot_dimension_numbers<[1], [1], [0], [0], [0, 0, 1, 0], [], []>} : vector<2x32xf32>, vector<128x32xf32>, vector<2x128xf32> -> vector<2x128xf32>
    %41 = vector.extract_strided_slice %10 {offsets = [2, 0], sizes = [2, 128], strides = [1, 1]} : vector<16x128xf32> to vector<2x128xf32>
    %42 = arith.addf %40, %41 : vector<2x128xf32>
    %cst_17 = arith.constant 5.000000e-01 : f32
    %43 = vector.broadcast %cst_17 : f32 to vector<2x128xf32>
    %44 = arith.mulf %43, %42 : vector<2x128xf32>
    %45 = arith.select %16, %42, %44 : vector<2x128xi1>, vector<2x128xf32>
    %46 = math.tanh %45 : vector<2x128xf32>
    %cst_18 = arith.constant 1.000000e+00 : f32
    %47 = vector.broadcast %cst_18 : f32 to vector<2x128xf32>
    %48 = arith.addf %46, %47 : vector<2x128xf32>
    %cst_19 = arith.constant 5.000000e-01 : f32
    %49 = vector.broadcast %cst_19 : f32 to vector<2x128xf32>
    %50 = arith.mulf %49, %48 : vector<2x128xf32>
    %51 = arith.select %16, %46, %50 : vector<2x128xi1>, vector<2x128xf32>
    %52 = vector.extract_strided_slice %51 {offsets = [0, 0], sizes = [2, 32], strides = [1, 1]} : vector<2x128xf32> to vector<2x32xf32>
    %53 = vector.extract_strided_slice %51 {offsets = [0, 32], sizes = [2, 32], strides = [1, 1]} : vector<2x128xf32> to vector<2x32xf32>
    %54 = vector.extract_strided_slice %51 {offsets = [0, 64], sizes = [2, 32], strides = [1, 1]} : vector<2x128xf32> to vector<2x32xf32>
    %55 = vector.extract_strided_slice %51 {offsets = [0, 96], sizes = [2, 32], strides = [1, 1]} : vector<2x128xf32> to vector<2x32xf32>
    %56 = arith.mulf %53, %37 : vector<2x32xf32>
    %57 = arith.mulf %52, %54 : vector<2x32xf32>
    %58 = arith.addf %56, %57 : vector<2x32xf32>
    %59 = math.tanh %58 : vector<2x32xf32>
    %60 = arith.mulf %55, %59 : vector<2x32xf32>
    %cst_20 = arith.constant dense<0.000000e+00> : vector<2x128xf32>
    %61 = tpu.matmul %60, %0, %cst_20 {dimension_numbers = #tpu.dot_dimension_numbers<[1], [1], [0], [0], [0, 0, 1, 0], [], []>} : vector<2x32xf32>, vector<128x32xf32>, vector<2x128xf32> -> vector<2x128xf32>
    %62 = vector.extract_strided_slice %10 {offsets = [4, 0], sizes = [2, 128], strides = [1, 1]} : vector<16x128xf32> to vector<2x128xf32>
    %63 = arith.addf %61, %62 : vector<2x128xf32>
    %cst_21 = arith.constant 5.000000e-01 : f32
    %64 = vector.broadcast %cst_21 : f32 to vector<2x128xf32>
    %65 = arith.mulf %64, %63 : vector<2x128xf32>
    %66 = arith.select %16, %63, %65 : vector<2x128xi1>, vector<2x128xf32>
    %67 = math.tanh %66 : vector<2x128xf32>
    %cst_22 = arith.constant 1.000000e+00 : f32
    %68 = vector.broadcast %cst_22 : f32 to vector<2x128xf32>
    %69 = arith.addf %67, %68 : vector<2x128xf32>
    %cst_23 = arith.constant 5.000000e-01 : f32
    %70 = vector.broadcast %cst_23 : f32 to vector<2x128xf32>
    %71 = arith.mulf %70, %69 : vector<2x128xf32>
    %72 = arith.select %16, %67, %71 : vector<2x128xi1>, vector<2x128xf32>
    %73 = vector.extract_strided_slice %72 {offsets = [0, 0], sizes = [2, 32], strides = [1, 1]} : vector<2x128xf32> to vector<2x32xf32>
    %74 = vector.extract_strided_slice %72 {offsets = [0, 32], sizes = [2, 32], strides = [1, 1]} : vector<2x128xf32> to vector<2x32xf32>
    %75 = vector.extract_strided_slice %72 {offsets = [0, 64], sizes = [2, 32], strides = [1, 1]} : vector<2x128xf32> to vector<2x32xf32>
    %76 = vector.extract_strided_slice %72 {offsets = [0, 96], sizes = [2, 32], strides = [1, 1]} : vector<2x128xf32> to vector<2x32xf32>
    %77 = arith.mulf %74, %58 : vector<2x32xf32>
    %78 = arith.mulf %73, %75 : vector<2x32xf32>
    %79 = arith.addf %77, %78 : vector<2x32xf32>
    %80 = math.tanh %79 : vector<2x32xf32>
    %81 = arith.mulf %76, %80 : vector<2x32xf32>
    %cst_24 = arith.constant dense<0.000000e+00> : vector<2x128xf32>
    %82 = tpu.matmul %81, %0, %cst_24 {dimension_numbers = #tpu.dot_dimension_numbers<[1], [1], [0], [0], [0, 0, 1, 0], [], []>} : vector<2x32xf32>, vector<128x32xf32>, vector<2x128xf32> -> vector<2x128xf32>
    %83 = vector.extract_strided_slice %10 {offsets = [6, 0], sizes = [2, 128], strides = [1, 1]} : vector<16x128xf32> to vector<2x128xf32>
    %84 = arith.addf %82, %83 : vector<2x128xf32>
    %cst_25 = arith.constant 5.000000e-01 : f32
    %85 = vector.broadcast %cst_25 : f32 to vector<2x128xf32>
    %86 = arith.mulf %85, %84 : vector<2x128xf32>
    %87 = arith.select %16, %84, %86 : vector<2x128xi1>, vector<2x128xf32>
    %88 = math.tanh %87 : vector<2x128xf32>
    %cst_26 = arith.constant 1.000000e+00 : f32
    %89 = vector.broadcast %cst_26 : f32 to vector<2x128xf32>
    %90 = arith.addf %88, %89 : vector<2x128xf32>
    %cst_27 = arith.constant 5.000000e-01 : f32
    %91 = vector.broadcast %cst_27 : f32 to vector<2x128xf32>
    %92 = arith.mulf %91, %90 : vector<2x128xf32>
    %93 = arith.select %16, %88, %92 : vector<2x128xi1>, vector<2x128xf32>
    %94 = vector.extract_strided_slice %93 {offsets = [0, 0], sizes = [2, 32], strides = [1, 1]} : vector<2x128xf32> to vector<2x32xf32>
    %95 = vector.extract_strided_slice %93 {offsets = [0, 32], sizes = [2, 32], strides = [1, 1]} : vector<2x128xf32> to vector<2x32xf32>
    %96 = vector.extract_strided_slice %93 {offsets = [0, 64], sizes = [2, 32], strides = [1, 1]} : vector<2x128xf32> to vector<2x32xf32>
    %97 = vector.extract_strided_slice %93 {offsets = [0, 96], sizes = [2, 32], strides = [1, 1]} : vector<2x128xf32> to vector<2x32xf32>
    %98 = arith.mulf %95, %79 : vector<2x32xf32>
    %99 = arith.mulf %94, %96 : vector<2x32xf32>
    %100 = arith.addf %98, %99 : vector<2x32xf32>
    %101 = math.tanh %100 : vector<2x32xf32>
    %102 = arith.mulf %97, %101 : vector<2x32xf32>
    %cst_28 = arith.constant dense<0.000000e+00> : vector<2x128xf32>
    %103 = tpu.matmul %102, %0, %cst_28 {dimension_numbers = #tpu.dot_dimension_numbers<[1], [1], [0], [0], [0, 0, 1, 0], [], []>} : vector<2x32xf32>, vector<128x32xf32>, vector<2x128xf32> -> vector<2x128xf32>
    %104 = vector.extract_strided_slice %10 {offsets = [8, 0], sizes = [2, 128], strides = [1, 1]} : vector<16x128xf32> to vector<2x128xf32>
    %105 = arith.addf %103, %104 : vector<2x128xf32>
    %cst_29 = arith.constant 5.000000e-01 : f32
    %106 = vector.broadcast %cst_29 : f32 to vector<2x128xf32>
    %107 = arith.mulf %106, %105 : vector<2x128xf32>
    %108 = arith.select %16, %105, %107 : vector<2x128xi1>, vector<2x128xf32>
    %109 = math.tanh %108 : vector<2x128xf32>
    %cst_30 = arith.constant 1.000000e+00 : f32
    %110 = vector.broadcast %cst_30 : f32 to vector<2x128xf32>
    %111 = arith.addf %109, %110 : vector<2x128xf32>
    %cst_31 = arith.constant 5.000000e-01 : f32
    %112 = vector.broadcast %cst_31 : f32 to vector<2x128xf32>
    %113 = arith.mulf %112, %111 : vector<2x128xf32>
    %114 = arith.select %16, %109, %113 : vector<2x128xi1>, vector<2x128xf32>
    %115 = vector.extract_strided_slice %114 {offsets = [0, 0], sizes = [2, 32], strides = [1, 1]} : vector<2x128xf32> to vector<2x32xf32>
    %116 = vector.extract_strided_slice %114 {offsets = [0, 32], sizes = [2, 32], strides = [1, 1]} : vector<2x128xf32> to vector<2x32xf32>
    %117 = vector.extract_strided_slice %114 {offsets = [0, 64], sizes = [2, 32], strides = [1, 1]} : vector<2x128xf32> to vector<2x32xf32>
    %118 = vector.extract_strided_slice %114 {offsets = [0, 96], sizes = [2, 32], strides = [1, 1]} : vector<2x128xf32> to vector<2x32xf32>
    %119 = arith.mulf %116, %100 : vector<2x32xf32>
    %120 = arith.mulf %115, %117 : vector<2x32xf32>
    %121 = arith.addf %119, %120 : vector<2x32xf32>
    %122 = math.tanh %121 : vector<2x32xf32>
    %123 = arith.mulf %118, %122 : vector<2x32xf32>
    %cst_32 = arith.constant dense<0.000000e+00> : vector<2x128xf32>
    %124 = tpu.matmul %123, %0, %cst_32 {dimension_numbers = #tpu.dot_dimension_numbers<[1], [1], [0], [0], [0, 0, 1, 0], [], []>} : vector<2x32xf32>, vector<128x32xf32>, vector<2x128xf32> -> vector<2x128xf32>
    %125 = vector.extract_strided_slice %10 {offsets = [10, 0], sizes = [2, 128], strides = [1, 1]} : vector<16x128xf32> to vector<2x128xf32>
    %126 = arith.addf %124, %125 : vector<2x128xf32>
    %cst_33 = arith.constant 5.000000e-01 : f32
    %127 = vector.broadcast %cst_33 : f32 to vector<2x128xf32>
    %128 = arith.mulf %127, %126 : vector<2x128xf32>
    %129 = arith.select %16, %126, %128 : vector<2x128xi1>, vector<2x128xf32>
    %130 = math.tanh %129 : vector<2x128xf32>
    %cst_34 = arith.constant 1.000000e+00 : f32
    %131 = vector.broadcast %cst_34 : f32 to vector<2x128xf32>
    %132 = arith.addf %130, %131 : vector<2x128xf32>
    %cst_35 = arith.constant 5.000000e-01 : f32
    %133 = vector.broadcast %cst_35 : f32 to vector<2x128xf32>
    %134 = arith.mulf %133, %132 : vector<2x128xf32>
    %135 = arith.select %16, %130, %134 : vector<2x128xi1>, vector<2x128xf32>
    %136 = vector.extract_strided_slice %135 {offsets = [0, 0], sizes = [2, 32], strides = [1, 1]} : vector<2x128xf32> to vector<2x32xf32>
    %137 = vector.extract_strided_slice %135 {offsets = [0, 32], sizes = [2, 32], strides = [1, 1]} : vector<2x128xf32> to vector<2x32xf32>
    %138 = vector.extract_strided_slice %135 {offsets = [0, 64], sizes = [2, 32], strides = [1, 1]} : vector<2x128xf32> to vector<2x32xf32>
    %139 = vector.extract_strided_slice %135 {offsets = [0, 96], sizes = [2, 32], strides = [1, 1]} : vector<2x128xf32> to vector<2x32xf32>
    %140 = arith.mulf %137, %121 : vector<2x32xf32>
    %141 = arith.mulf %136, %138 : vector<2x32xf32>
    %142 = arith.addf %140, %141 : vector<2x32xf32>
    %143 = math.tanh %142 : vector<2x32xf32>
    %144 = arith.mulf %139, %143 : vector<2x32xf32>
    %cst_36 = arith.constant dense<0.000000e+00> : vector<2x128xf32>
    %145 = tpu.matmul %144, %0, %cst_36 {dimension_numbers = #tpu.dot_dimension_numbers<[1], [1], [0], [0], [0, 0, 1, 0], [], []>} : vector<2x32xf32>, vector<128x32xf32>, vector<2x128xf32> -> vector<2x128xf32>
    %146 = vector.extract_strided_slice %10 {offsets = [12, 0], sizes = [2, 128], strides = [1, 1]} : vector<16x128xf32> to vector<2x128xf32>
    %147 = arith.addf %145, %146 : vector<2x128xf32>
    %cst_37 = arith.constant 5.000000e-01 : f32
    %148 = vector.broadcast %cst_37 : f32 to vector<2x128xf32>
    %149 = arith.mulf %148, %147 : vector<2x128xf32>
    %150 = arith.select %16, %147, %149 : vector<2x128xi1>, vector<2x128xf32>
    %151 = math.tanh %150 : vector<2x128xf32>
    %cst_38 = arith.constant 1.000000e+00 : f32
    %152 = vector.broadcast %cst_38 : f32 to vector<2x128xf32>
    %153 = arith.addf %151, %152 : vector<2x128xf32>
    %cst_39 = arith.constant 5.000000e-01 : f32
    %154 = vector.broadcast %cst_39 : f32 to vector<2x128xf32>
    %155 = arith.mulf %154, %153 : vector<2x128xf32>
    %156 = arith.select %16, %151, %155 : vector<2x128xi1>, vector<2x128xf32>
    %157 = vector.extract_strided_slice %156 {offsets = [0, 0], sizes = [2, 32], strides = [1, 1]} : vector<2x128xf32> to vector<2x32xf32>
    %158 = vector.extract_strided_slice %156 {offsets = [0, 32], sizes = [2, 32], strides = [1, 1]} : vector<2x128xf32> to vector<2x32xf32>
    %159 = vector.extract_strided_slice %156 {offsets = [0, 64], sizes = [2, 32], strides = [1, 1]} : vector<2x128xf32> to vector<2x32xf32>
    %160 = vector.extract_strided_slice %156 {offsets = [0, 96], sizes = [2, 32], strides = [1, 1]} : vector<2x128xf32> to vector<2x32xf32>
    %161 = arith.mulf %158, %142 : vector<2x32xf32>
    %162 = arith.mulf %157, %159 : vector<2x32xf32>
    %163 = arith.addf %161, %162 : vector<2x32xf32>
    %164 = math.tanh %163 : vector<2x32xf32>
    %165 = arith.mulf %160, %164 : vector<2x32xf32>
    %cst_40 = arith.constant dense<0.000000e+00> : vector<2x128xf32>
    %166 = tpu.matmul %165, %0, %cst_40 {dimension_numbers = #tpu.dot_dimension_numbers<[1], [1], [0], [0], [0, 0, 1, 0], [], []>} : vector<2x32xf32>, vector<128x32xf32>, vector<2x128xf32> -> vector<2x128xf32>
    %167 = vector.extract_strided_slice %10 {offsets = [14, 0], sizes = [2, 128], strides = [1, 1]} : vector<16x128xf32> to vector<2x128xf32>
    %168 = arith.addf %166, %167 : vector<2x128xf32>
    %cst_41 = arith.constant 5.000000e-01 : f32
    %169 = vector.broadcast %cst_41 : f32 to vector<2x128xf32>
    %170 = arith.mulf %169, %168 : vector<2x128xf32>
    %171 = arith.select %16, %168, %170 : vector<2x128xi1>, vector<2x128xf32>
    %172 = math.tanh %171 : vector<2x128xf32>
    %cst_42 = arith.constant 1.000000e+00 : f32
    %173 = vector.broadcast %cst_42 : f32 to vector<2x128xf32>
    %174 = arith.addf %172, %173 : vector<2x128xf32>
    %cst_43 = arith.constant 5.000000e-01 : f32
    %175 = vector.broadcast %cst_43 : f32 to vector<2x128xf32>
    %176 = arith.mulf %175, %174 : vector<2x128xf32>
    %177 = arith.select %16, %172, %176 : vector<2x128xi1>, vector<2x128xf32>
    %178 = vector.extract_strided_slice %177 {offsets = [0, 0], sizes = [2, 32], strides = [1, 1]} : vector<2x128xf32> to vector<2x32xf32>
    %179 = vector.extract_strided_slice %177 {offsets = [0, 32], sizes = [2, 32], strides = [1, 1]} : vector<2x128xf32> to vector<2x32xf32>
    %180 = vector.extract_strided_slice %177 {offsets = [0, 64], sizes = [2, 32], strides = [1, 1]} : vector<2x128xf32> to vector<2x32xf32>
    %181 = vector.extract_strided_slice %177 {offsets = [0, 96], sizes = [2, 32], strides = [1, 1]} : vector<2x128xf32> to vector<2x32xf32>
    %182 = arith.mulf %179, %163 : vector<2x32xf32>
    %183 = arith.mulf %178, %180 : vector<2x32xf32>
    %184 = arith.addf %182, %183 : vector<2x32xf32>
    %185 = math.tanh %184 : vector<2x32xf32>
    %186 = arith.mulf %181, %185 : vector<2x32xf32>
    %187 = vector.extract_strided_slice %186 {offsets = [0, 0], sizes = [1, 32], strides = [1, 1]} : vector<2x32xf32> to vector<1x32xf32>
    %188 = vector.extract_strided_slice %186 {offsets = [1, 0], sizes = [1, 32], strides = [1, 1]} : vector<2x32xf32> to vector<1x32xf32>
    %189 = vector.extract_strided_slice %184 {offsets = [0, 0], sizes = [1, 32], strides = [1, 1]} : vector<2x32xf32> to vector<1x32xf32>
    %190 = vector.extract_strided_slice %184 {offsets = [1, 0], sizes = [1, 32], strides = [1, 1]} : vector<2x32xf32> to vector<1x32xf32>
    %191 = tpu.concatenate %187, %188, %189, %190 in 1 : vector<1x32xf32>, vector<1x32xf32>, vector<1x32xf32>, vector<1x32xf32> -> vector<1x128xf32>
    %c0_44 = arith.constant 0 : index
    %c0_45 = arith.constant 0 : index
    %192 = vector.load %arg7[%c0_44, %c0_45] : memref<1x128xf32, #tpu.memory_space<vmem>>, vector<1x128xf32>
    tpu.vector_store %arg7[%c0_44, %c0_45], %191 {strides = array<i32>} : memref<1x128xf32, #tpu.memory_space<vmem>>, vector<1x128xf32>,
    return
  }
}

</mosaic_0001>

<llo_original>
// kernel: decoder_lstm_forward.1
$region0: #{decoder_lstm_forward.1}
  #allocation0 [shape = 'u32[]', space=smem, size = 0x4, offset = 0x4, fixed_abs, tag = 'smem constant byte address 0x4 - core index']
  #allocation1 [shape = 'u32[72,128]{1,0:T(1,128)}', space=vmem, size = 0x9000, scoped, tag = 'internal scratch']
  %s0 = inlined_call_operand.vmem [shape: f32[16,1], index: 0, kind: input, shape index: {}]
  %s1 = inlined_call_operand.vmem [shape: f32[2,32], index: 1, kind: input, shape index: {}]
  %s2 = inlined_call_operand.vmem [shape: f32[2,32], index: 2, kind: input, shape index: {}]
  %s3 = inlined_call_operand.vmem [shape: f32[1,128], index: 3, kind: input, shape index: {}]
  %s4 = inlined_call_operand.vmem [shape: f32[128,32], index: 4, kind: input, shape index: {}]
  %s5 = inlined_call_operand.vmem [shape: f32[1,128], index: 5, kind: input, shape index: {}]
  %s6 = inlined_call_operand.vmem [shape: f32[1,128], index: 6, kind: input, shape index: {}]
  %s7 = inlined_call_operand.vmem [shape: f32[1,128], index: 7, kind: output, shape index: {}]
  %s8 = sld [smem:[#allocation0]]
  $region38: #{decoder_lstm_forward.1} parent=0
    _
  %s10 = ssub.s32 1, %s8
  %s11 = scalar_select 0, %s10, %s8
  // Predicated region
  $region2: #{decoder_lstm_forward.1} parent=0 // pred_check
    _
  $region3: #{decoder_lstm_forward.1} parent=0 // pred_check_branch
    %13 = sbr.rel (0) target = $region5
  $region4: #{decoder_lstm_forward.1} parent=0 // pred_region
    _
  $region5: #{decoder_lstm_forward.1} parent=0 // pred_fallthru
    _
  // Predicated region
  $region6: #{decoder_lstm_forward.1} parent=0 // pred_check
    _
  $region7: #{decoder_lstm_forward.1} parent=0 // pred_check_branch
    %15 = sbr.rel (0) target = $region9
  $region8: #{decoder_lstm_forward.1} parent=0 // pred_region
    _
  $region9: #{decoder_lstm_forward.1} parent=0 // pred_fallthru
    _
  // Predicated region
  $region10: #{decoder_lstm_forward.1} parent=0 // pred_check
    _
  $region11: #{decoder_lstm_forward.1} parent=0 // pred_check_branch
    %17 = sbr.rel (0) target = $region13
  $region12: #{decoder_lstm_forward.1} parent=0 // pred_region
    _
  $region13: #{decoder_lstm_forward.1} parent=0 // pred_fallthru
    _
  // Predicated region
  $region14: #{decoder_lstm_forward.1} parent=0 // pred_check
    _
  $region15: #{decoder_lstm_forward.1} parent=0 // pred_check_branch
    %19 = sbr.rel (0) target = $region17
  $region16: #{decoder_lstm_forward.1} parent=0 // pred_region
    _
  $region17: #{decoder_lstm_forward.1} parent=0 // pred_fallthru
    _
  // Predicated region
  $region18: #{decoder_lstm_forward.1} parent=0 // pred_check
    _
  $region19: #{decoder_lstm_forward.1} parent=0 // pred_check_branch
    %21 = sbr.rel (0) target = $region21
  $region20: #{decoder_lstm_forward.1} parent=0 // pred_region
    _
  $region21: #{decoder_lstm_forward.1} parent=0 // pred_fallthru
    _
  // Predicated region
  $region22: #{decoder_lstm_forward.1} parent=0 // pred_check
    _
  $region23: #{decoder_lstm_forward.1} parent=0 // pred_check_branch
    %23 = sbr.rel (0) target = $region25
  $region24: #{decoder_lstm_forward.1} parent=0 // pred_region
    _
  $region25: #{decoder_lstm_forward.1} parent=0 // pred_fallthru
    _
  // Predicated region
  $region26: #{decoder_lstm_forward.1} parent=0 // pred_check
    _
  $region27: #{decoder_lstm_forward.1} parent=0 // pred_check_branch
    %25 = sbr.rel (0) target = $region29
  $region28: #{decoder_lstm_forward.1} parent=0 // pred_region
    _
  $region29: #{decoder_lstm_forward.1} parent=0 // pred_fallthru
    _
  %v26 = vld [vmem:[%s4] sm:$0xff]
  %v27 = vld [vmem:[%s4 + $0x8] sm:$0xff]
  %v28 = vld [vmem:[%s4 + $0x10] sm:$0xff]
  %v29 = vld [vmem:[%s4 + $0x18] sm:$0xff]
  %v30 = vld [vmem:[%s4 + $0x20] sm:$0xff]
  %v31 = vld [vmem:[%s4 + $0x28] sm:$0xff]
  %v32 = vld [vmem:[%s4 + $0x30] sm:$0xff]
  %v33 = vld [vmem:[%s4 + $0x38] sm:$0xff]
  %v34 = vld [vmem:[%s4 + $0x40] sm:$0xff]
  %v35 = vld [vmem:[%s4 + $0x48] sm:$0xff]
  %v36 = vld [vmem:[%s4 + $0x50] sm:$0xff]
  %v37 = vld [vmem:[%s4 + $0x58] sm:$0xff]
  %v38 = vld [vmem:[%s4 + $0x60] sm:$0xff]
  %v39 = vld [vmem:[%s4 + $0x68] sm:$0xff]
  %v40 = vld [vmem:[%s4 + $0x70] sm:$0xff]
  %v41 = vld [vmem:[%s4 + $0x78] sm:$0xff]
  %v42 = vld [vmem:[%s5] sm:$0x1]
  %v43 = vld [vmem:[%s6] sm:$0x1]
  %v44 = vadd.f32 %v42, %v43
  %v45 = vld [vmem:[%s0] sm:$0xff]
  %v46 = vld [vmem:[%s0 + $0x8] sm:$0xff]
  %v47 = vld [vmem:[%s3] sm:$0x1]
  %49 = vset.pattern.permute.xlu0 0
  %50 = vperm.xlu0 %49, %v45
  %v51 = vpop.permute.xlu0 %50
  %54 = vset.pattern.permute.xlu0 0
  %55 = vperm.xlu0 %54, %v46
  %v56 = vpop.permute.xlu0 %55
  %v59 = vperm.slane %v47, 0
  %v61 = vmul.f32 %v51, %v59
  %v62 = vmul.f32 %v56, %v59
  %v64 = vperm.slane %v44, 0
  %v66 = vadd.f32 %v61, %v64
  %v67 = vadd.f32 %v62, %v64
  %v68 = vlaneseq
  %v69 = vand.u32 %v68, 127
  %vm70 = vcmp.ge.s32.totalorder %v69, 64
  %vm71 = vcmp.lt.s32.totalorder %v69, 96
  %vm72 = vmand %vm70, %vm71
  %v73 = vld [vmem:[%s1] sm:$0x3]
  %v74 = vld [vmem:[%s2] sm:$0x3]
  %vm75 = vcmask 261120
  %v77 = vsel %vm75, %v73, 0
  %v80 = vsel %vm75, %v26, 0
  %v83 = vsel %vm75, %v27, 0
  %v86 = vsel %vm75, %v28, 0
  %v89 = vsel %vm75, %v29, 0
  %v92 = vsel %vm75, %v30, 0
  %v95 = vsel %vm75, %v31, 0
  %v98 = vsel %vm75, %v32, 0
  %v101 = vsel %vm75, %v33, 0
  %v104 = vsel %vm75, %v34, 0
  %v107 = vsel %vm75, %v35, 0
  %v110 = vsel %vm75, %v36, 0
  %v113 = vsel %vm75, %v37, 0
  %v116 = vsel %vm75, %v38, 0
  %v119 = vsel %vm75, %v39, 0
  %v122 = vsel %vm75, %v40, 0
  %v125 = vsel %vm75, %v41, 0
  %127 = vmatpush.xpose.msra.mxu0 %v125
  %128 = vmatpush.xpose.msra.mxu0 %v122
  %129 = vmatpush.xpose.msra.mxu0 %v119
  %130 = vmatpush.xpose.msra.mxu0 %v116
  %131 = vmatpush.xpose.msra.mxu0 %v113
  %132 = vmatpush.xpose.msra.mxu0 %v110
  %133 = vmatpush.xpose.msra.mxu0 %v107
  %134 = vmatpush.xpose.msra.mxu0 %v104
  %135 = vmatpush.xpose.msra.mxu0 %v101
  %136 = vmatpush.xpose.msra.mxu0 %v98
  %137 = vmatpush.xpose.msra.mxu0 %v95
  %138 = vmatpush.xpose.msra.mxu0 %v92
  %139 = vmatpush.xpose.msra.mxu0 %v89
  %140 = vmatpush.xpose.msra.mxu0 %v86
  %141 = vmatpush.xpose.msra.mxu0 %v83
  %142 = vmatpush.xpose.msra.mxu0 %v80
  %143 = vmatmul.f32.gmra.mxu0 %v77
  %v144 = vpop.f32.mrf.mxu0
  %v145 = vadd.f32 %v66, %v144
  %146 = vdwg.mxu0
  %v147 = vmul.f32 %v145, 0.5
  %v148 = vsel %vm72, %v145, %v147
  %v149 = vtanh.pop %v148
  %v150 = vadd.f32 %v149, 1.0
  %v151 = vmul.f32 %v150, 0.5
  %v152 = vsel %vm72, %v149, %v151
  %154 = vrot.lane.b32.xlu0 %v74, 32
  %v155 = vpop.permute.xlu0 %154
  %v157 = vmul.f32 %v152, %v155
  %159 = vrot.lane.b32.xlu0 %v152, 64
  %v160 = vpop.permute.xlu0 %159
  %v162 = vmul.f32 %v152, %v160
  %164 = vrot.lane.b32.xlu0 %v162, 32
  %v165 = vpop.permute.xlu0 %164
  %v167 = vadd.f32 %v157, %v165
  %v168 = vtanh.pop %v167
  %170 = vrot.lane.b32.xlu0 %v168, 64
  %v171 = vpop.permute.xlu0 %170
  %v173 = vmul.f32 %v152, %v171
  %175 = vrot.lane.b32.xlu0 %v173, 32
  %v176 = vpop.permute.xlu0 %175
  %v178 = vrot.slane %v66, 2
  %v180 = vsel %vm75, %v176, 0
  %182 = vmatpush.xpose.msra.mxu0 %v125
  %183 = vmatpush.xpose.msra.mxu0 %v122
  %184 = vmatpush.xpose.msra.mxu0 %v119
  %185 = vmatpush.xpose.msra.mxu0 %v116
  %186 = vmatpush.xpose.msra.mxu0 %v113
  %187 = vmatpush.xpose.msra.mxu0 %v110
  %188 = vmatpush.xpose.msra.mxu0 %v107
  %189 = vmatpush.xpose.msra.mxu0 %v104
  %190 = vmatpush.xpose.msra.mxu0 %v101
  %191 = vmatpush.xpose.msra.mxu0 %v98
  %192 = vmatpush.xpose.msra.mxu0 %v95
  %193 = vmatpush.xpose.msra.mxu0 %v92
  %194 = vmatpush.xpose.msra.mxu0 %v89
  %195 = vmatpush.xpose.msra.mxu0 %v86
  %196 = vmatpush.xpose.msra.mxu0 %v83
  %197 = vmatpush.xpose.msra.mxu0 %v80
  %198 = vmatmul.f32.gmra.mxu0 %v180
  %v199 = vpop.f32.mrf.mxu0
  %v200 = vadd.f32 %v178, %v199
  %201 = vdwg.mxu0
  %v202 = vmul.f32 %v200, 0.5
  %v203 = vsel %vm72, %v200, %v202
  %v204 = vtanh.pop %v203
  %v205 = vadd.f32 %v204, 1.0
  %v206 = vmul.f32 %v205, 0.5
  %v207 = vsel %vm72, %v204, %v206
  %v208 = vmul.f32 %v207, %v167
  %210 = vrot.lane.b32.xlu0 %v207, 64
  %v211 = vpop.permute.xlu0 %210
  %v213 = vmul.f32 %v207, %v211
  %215 = vrot.lane.b32.xlu0 %v213, 32
  %v216 = vpop.permute.xlu0 %215
  %v218 = vadd.f32 %v208, %v216
  %v219 = vtanh.pop %v218
  %221 = vrot.lane.b32.xlu0 %v219, 64
  %v222 = vpop.permute.xlu0 %221
  %v224 = vmul.f32 %v207, %v222
  %226 = vrot.lane.b32.xlu0 %v224, 32
  %v227 = vpop.permute.xlu0 %226
  %v228 = vrot.slane %v66, 4
  %v230 = vsel %vm75, %v227, 0
  %232 = vmatpush.xpose.msra.mxu0 %v125
  %233 = vmatpush.xpose.msra.mxu0 %v122
  %234 = vmatpush.xpose.msra.mxu0 %v119
  %235 = vmatpush.xpose.msra.mxu0 %v116
  %236 = vmatpush.xpose.msra.mxu0 %v113
  %237 = vmatpush.xpose.msra.mxu0 %v110
  %238 = vmatpush.xpose.msra.mxu0 %v107
  %239 = vmatpush.xpose.msra.mxu0 %v104
  %240 = vmatpush.xpose.msra.mxu0 %v101
  %241 = vmatpush.xpose.msra.mxu0 %v98
  %242 = vmatpush.xpose.msra.mxu0 %v95
  %243 = vmatpush.xpose.msra.mxu0 %v92
  %244 = vmatpush.xpose.msra.mxu0 %v89
  %245 = vmatpush.xpose.msra.mxu0 %v86
  %246 = vmatpush.xpose.msra.mxu0 %v83
  %247 = vmatpush.xpose.msra.mxu0 %v80
  %248 = vmatmul.f32.gmra.mxu0 %v230
  %v249 = vpop.f32.mrf.mxu0
  %v250 = vadd.f32 %v228, %v249
  %251 = vdwg.mxu0
  %v252 = vmul.f32 %v250, 0.5
  %v253 = vsel %vm72, %v250, %v252
  %v254 = vtanh.pop %v253
  %v255 = vadd.f32 %v254, 1.0
  %v256 = vmul.f32 %v255, 0.5
  %v257 = vsel %vm72, %v254, %v256
  %v258 = vmul.f32 %v257, %v218
  %260 = vrot.lane.b32.xlu0 %v257, 64
  %v261 = vpop.permute.xlu0 %260
  %v263 = vmul.f32 %v257, %v261
  %265 = vrot.lane.b32.xlu0 %v263, 32
  %v266 = vpop.permute.xlu0 %265
  %v268 = vadd.f32 %v258, %v266
  %v269 = vtanh.pop %v268
  %271 = vrot.lane.b32.xlu0 %v269, 64
  %v272 = vpop.permute.xlu0 %271
  %v274 = vmul.f32 %v257, %v272
  %276 = vrot.lane.b32.xlu0 %v274, 32
  %v277 = vpop.permute.xlu0 %276
  %v278 = vrot.slane %v66, 6
  %v280 = vsel %vm75, %v277, 0
  %282 = vmatpush.xpose.msra.mxu0 %v125
  %283 = vmatpush.xpose.msra.mxu0 %v122
  %284 = vmatpush.xpose.msra.mxu0 %v119
  %285 = vmatpush.xpose.msra.mxu0 %v116
  %286 = vmatpush.xpose.msra.mxu0 %v113
  %287 = vmatpush.xpose.msra.mxu0 %v110
  %288 = vmatpush.xpose.msra.mxu0 %v107
  %289 = vmatpush.xpose.msra.mxu0 %v104
  %290 = vmatpush.xpose.msra.mxu0 %v101
  %291 = vmatpush.xpose.msra.mxu0 %v98
  %292 = vmatpush.xpose.msra.mxu0 %v95
  %293 = vmatpush.xpose.msra.mxu0 %v92
  %294 = vmatpush.xpose.msra.mxu0 %v89
  %295 = vmatpush.xpose.msra.mxu0 %v86
  %296 = vmatpush.xpose.msra.mxu0 %v83
  %297 = vmatpush.xpose.msra.mxu0 %v80
  %298 = vmatmul.f32.gmra.mxu0 %v280
  %v299 = vpop.f32.mrf.mxu0
  %v300 = vadd.f32 %v278, %v299
  %301 = vdwg.mxu0
  %v302 = vmul.f32 %v300, 0.5
  %v303 = vsel %vm72, %v300, %v302
  %v304 = vtanh.pop %v303
  %v305 = vadd.f32 %v304, 1.0
  %v306 = vmul.f32 %v305, 0.5
  %v307 = vsel %vm72, %v304, %v306
  %v308 = vmul.f32 %v307, %v268
  %310 = vrot.lane.b32.xlu0 %v307, 64
  %v311 = vpop.permute.xlu0 %310
  %v313 = vmul.f32 %v307, %v311
  %315 = vrot.lane.b32.xlu0 %v313, 32
  %v316 = vpop.permute.xlu0 %315
  %v318 = vadd.f32 %v308, %v316
  %v319 = vtanh.pop %v318
  %321 = vrot.lane.b32.xlu0 %v319, 64
  %v322 = vpop.permute.xlu0 %321
  %v324 = vmul.f32 %v307, %v322
  %326 = vrot.lane.b32.xlu0 %v324, 32
  %v327 = vpop.permute.xlu0 %326
  %v328 = vsel %vm75, %v327, 0
  %330 = vmatpush.xpose.msra.mxu0 %v125
  %331 = vmatpush.xpose.msra.mxu0 %v122
  %332 = vmatpush.xpose.msra.mxu0 %v119
  %333 = vmatpush.xpose.msra.mxu0 %v116
  %334 = vmatpush.xpose.msra.mxu0 %v113
  %335 = vmatpush.xpose.msra.mxu0 %v110
  %336 = vmatpush.xpose.msra.mxu0 %v107
  %337 = vmatpush.xpose.msra.mxu0 %v104
  %338 = vmatpush.xpose.msra.mxu0 %v101
  %339 = vmatpush.xpose.msra.mxu0 %v98
  %340 = vmatpush.xpose.msra.mxu0 %v95
  %341 = vmatpush.xpose.msra.mxu0 %v92
  %342 = vmatpush.xpose.msra.mxu0 %v89
  %343 = vmatpush.xpose.msra.mxu0 %v86
  %344 = vmatpush.xpose.msra.mxu0 %v83
  %345 = vmatpush.xpose.msra.mxu0 %v80
  %346 = vmatmul.f32.gmra.mxu0 %v328
  %v347 = vpop.f32.mrf.mxu0
  %v348 = vadd.f32 %v67, %v347
  %349 = vdwg.mxu0
  %v350 = vmul.f32 %v348, 0.5
  %v351 = vsel %vm72, %v348, %v350
  %v352 = vtanh.pop %v351
  %v353 = vadd.f32 %v352, 1.0
  %v354 = vmul.f32 %v353, 0.5
  %v355 = vsel %vm72, %v352, %v354
  %v356 = vmul.f32 %v355, %v318
  %358 = vrot.lane.b32.xlu0 %v355, 64
  %v359 = vpop.permute.xlu0 %358
  %v361 = vmul.f32 %v355, %v359
  %363 = vrot.lane.b32.xlu0 %v361, 32
  %v364 = vpop.permute.xlu0 %363
  %v366 = vadd.f32 %v356, %v364
  %v367 = vtanh.pop %v366
  %369 = vrot.lane.b32.xlu0 %v367, 64
  %v370 = vpop.permute.xlu0 %369
  %v372 = vmul.f32 %v355, %v370
  %374 = vrot.lane.b32.xlu0 %v372, 32
  %v375 = vpop.permute.xlu0 %374
  %v377 = vrot.slane %v67, 2
  %v379 = vsel %vm75, %v375, 0
  %381 = vmatpush.xpose.msra.mxu0 %v125
  %382 = vmatpush.xpose.msra.mxu0 %v122
  %383 = vmatpush.xpose.msra.mxu0 %v119
  %384 = vmatpush.xpose.msra.mxu0 %v116
  %385 = vmatpush.xpose.msra.mxu0 %v113
  %386 = vmatpush.xpose.msra.mxu0 %v110
  %387 = vmatpush.xpose.msra.mxu0 %v107
  %388 = vmatpush.xpose.msra.mxu0 %v104
  %389 = vmatpush.xpose.msra.mxu0 %v101
  %390 = vmatpush.xpose.msra.mxu0 %v98
  %391 = vmatpush.xpose.msra.mxu0 %v95
  %392 = vmatpush.xpose.msra.mxu0 %v92
  %393 = vmatpush.xpose.msra.mxu0 %v89
  %394 = vmatpush.xpose.msra.mxu0 %v86
  %395 = vmatpush.xpose.msra.mxu0 %v83
  %396 = vmatpush.xpose.msra.mxu0 %v80
  %397 = vmatmul.f32.gmra.mxu0 %v379
  %v398 = vpop.f32.mrf.mxu0
  %v399 = vadd.f32 %v377, %v398
  %400 = vdwg.mxu0
  %v401 = vmul.f32 %v399, 0.5
  %v402 = vsel %vm72, %v399, %v401
  %v403 = vtanh.pop %v402
  %v404 = vadd.f32 %v403, 1.0
  %v405 = vmul.f32 %v404, 0.5
  %v406 = vsel %vm72, %v403, %v405
  %v407 = vmul.f32 %v406, %v366
  %409 = vrot.lane.b32.xlu0 %v406, 64
  %v410 = vpop.permute.xlu0 %409
  %v412 = vmul.f32 %v406, %v410
  %414 = vrot.lane.b32.xlu0 %v412, 32
  %v415 = vpop.permute.xlu0 %414
  %v417 = vadd.f32 %v407, %v415
  %v418 = vtanh.pop %v417
  %420 = vrot.lane.b32.xlu0 %v418, 64
  %v421 = vpop.permute.xlu0 %420
  %v423 = vmul.f32 %v406, %v421
  %425 = vrot.lane.b32.xlu0 %v423, 32
  %v426 = vpop.permute.xlu0 %425
  %v427 = vrot.slane %v67, 4
  %v429 = vsel %vm75, %v426, 0
  %431 = vmatpush.xpose.msra.mxu0 %v125
  %432 = vmatpush.xpose.msra.mxu0 %v122
  %433 = vmatpush.xpose.msra.mxu0 %v119
  %434 = vmatpush.xpose.msra.mxu0 %v116
  %435 = vmatpush.xpose.msra.mxu0 %v113
  %436 = vmatpush.xpose.msra.mxu0 %v110
  %437 = vmatpush.xpose.msra.mxu0 %v107
  %438 = vmatpush.xpose.msra.mxu0 %v104
  %439 = vmatpush.xpose.msra.mxu0 %v101
  %440 = vmatpush.xpose.msra.mxu0 %v98
  %441 = vmatpush.xpose.msra.mxu0 %v95
  %442 = vmatpush.xpose.msra.mxu0 %v92
  %443 = vmatpush.xpose.msra.mxu0 %v89
  %444 = vmatpush.xpose.msra.mxu0 %v86
  %445 = vmatpush.xpose.msra.mxu0 %v83
  %446 = vmatpush.xpose.msra.mxu0 %v80
  %447 = vmatmul.f32.gmra.mxu0 %v429
  %v448 = vpop.f32.mrf.mxu0
  %v449 = vadd.f32 %v427, %v448
  %450 = vdwg.mxu0
  %v451 = vmul.f32 %v449, 0.5
  %v452 = vsel %vm72, %v449, %v451
  %v453 = vtanh.pop %v452
  %v454 = vadd.f32 %v453, 1.0
  %v455 = vmul.f32 %v454, 0.5
  %v456 = vsel %vm72, %v453, %v455
  %v457 = vmul.f32 %v456, %v417
  %459 = vrot.lane.b32.xlu0 %v456, 64
  %v460 = vpop.permute.xlu0 %459
  %v462 = vmul.f32 %v456, %v460
  %464 = vrot.lane.b32.xlu0 %v462, 32
  %v465 = vpop.permute.xlu0 %464
  %v467 = vadd.f32 %v457, %v465
  %v468 = vtanh.pop %v467
  %470 = vrot.lane.b32.xlu0 %v468, 64
  %v471 = vpop.permute.xlu0 %470
  %v473 = vmul.f32 %v456, %v471
  %475 = vrot.lane.b32.xlu0 %v473, 32
  %v476 = vpop.permute.xlu0 %475
  %v477 = vrot.slane %v67, 6
  %v479 = vsel %vm75, %v476, 0
  %481 = vmatpush.xpose.msra.mxu0 %v125
  %482 = vmatpush.xpose.msra.mxu0 %v122
  %483 = vmatpush.xpose.msra.mxu0 %v119
  %484 = vmatpush.xpose.msra.mxu0 %v116
  %485 = vmatpush.xpose.msra.mxu0 %v113
  %486 = vmatpush.xpose.msra.mxu0 %v110
  %487 = vmatpush.xpose.msra.mxu0 %v107
  %488 = vmatpush.xpose.msra.mxu0 %v104
  %489 = vmatpush.xpose.msra.mxu0 %v101
  %490 = vmatpush.xpose.msra.mxu0 %v98
  %491 = vmatpush.xpose.msra.mxu0 %v95
  %492 = vmatpush.xpose.msra.mxu0 %v92
  %493 = vmatpush.xpose.msra.mxu0 %v89
  %494 = vmatpush.xpose.msra.mxu0 %v86
  %495 = vmatpush.xpose.msra.mxu0 %v83
  %496 = vmatpush.xpose.msra.mxu0 %v80
  %497 = vmatmul.f32.gmra.mxu0 %v479
  %v498 = vpop.f32.mrf.mxu0
  %v499 = vadd.f32 %v477, %v498
  %500 = vdwg.mxu0
  %v501 = vmul.f32 %v499, 0.5
  %v502 = vsel %vm72, %v499, %v501
  %v503 = vtanh.pop %v502
  %v504 = vadd.f32 %v503, 1.0
  %v505 = vmul.f32 %v504, 0.5
  %v506 = vsel %vm72, %v503, %v505
  %v507 = vmul.f32 %v506, %v467
  %509 = vrot.lane.b32.xlu0 %v506, 64
  %v510 = vpop.permute.xlu0 %509
  %v512 = vmul.f32 %v506, %v510
  %514 = vrot.lane.b32.xlu0 %v512, 32
  %v515 = vpop.permute.xlu0 %514
  %v517 = vadd.f32 %v507, %v515
  %v518 = vtanh.pop %v517
  %520 = vrot.lane.b32.xlu0 %v518, 64
  %v521 = vpop.permute.xlu0 %520
  %v523 = vmul.f32 %v506, %v521
  %525 = vrot.lane.b32.xlu0 %v523, 32
  %v526 = vpop.permute.xlu0 %525
  %v528 = vrot.slane %v523, 1
  %529 = vrot.lane.b32.xlu0 %v528, 64
  %v530 = vpop.permute.xlu0 %529
  %533 = vrot.lane.b32.xlu0 %v517, 32
  %v534 = vpop.permute.xlu0 %533
  %v536 = vrot.slane %v517, 1
  %537 = vrot.lane.b32.xlu0 %v536, 64
  %v538 = vpop.permute.xlu0 %537
  %v540 = vsel %vm75, %v526, %v530
  %vm541 = vcmask 523264
  %v542 = vsel %vm541, %v540, %v534
  %vm543 = vcmask 785408
  %v544 = vsel %vm543, %v542, %v538
  %545 = vst [vmem:[%s7] sm:$0x1] %v544
  // Predicated region
  $region30: #{decoder_lstm_forward.1} parent=0 // pred_check
    _
  $region31: #{decoder_lstm_forward.1} parent=0 // pred_check_branch
    %547 = sbr.rel (0) target = $region33
  $region32: #{decoder_lstm_forward.1} parent=0 // pred_region
    _
  $region33: #{decoder_lstm_forward.1} parent=0 // pred_fallthru
    _
  // Predicated region
  $region34: #{decoder_lstm_forward.1} parent=0 // pred_check
    _
  $region35: #{decoder_lstm_forward.1} parent=0 // pred_check_branch
    %549 = sbr.rel (0) target = $region37
  $region36: #{decoder_lstm_forward.1} parent=0 // pred_region
    _
  $region37: #{decoder_lstm_forward.1} parent=0 // pred_fallthru
    _

</llo_original>
